<compile_context>
chip_gen: v6e
topology: v6e:2x2x1
jax: 0.10.0
libtpu: 0.0.40
codegen_flags: <defaults>
</compile_context>

<pallas_src>
import functools

import jax
import jax.numpy as jnp
from jax.experimental import pallas as pl
from jax.experimental.pallas import tpu as pltpu


_OFF = 128  # lane offset (multiple of 128) where conv2's input is parked


def _resblock_kernel(xp_ref, w1_ref, b1_ref, g1_ref, be1_ref,
                     w2_ref, b2_ref, g2_ref, be2_ref,
                     o_ref, hbuf, *, eps, slope):
    """Fused residual block for one batch element.

    xp_ref : (1, Cin, L+2)   input, zero-padded by 1 on each side of L
    w*_ref : (Cout, 3*Cin)   tap-folded Conv1d weights
    b*_ref, g*_ref, be*_ref : (Cout, 1) conv bias / GN gamma / GN beta
    o_ref  : (1, Cout, L)
    hbuf   : (Cout, L + 2*_OFF) f32 VMEM scratch (padded conv2 input)
    """
    C = o_ref.shape[1]
    L = o_ref.shape[2]

    def full_mean(v):                       # mean over the whole (C, L) sample
        s = jnp.sum(v, axis=1, keepdims=True)
        return jnp.sum(s, axis=0, keepdims=True) / (v.shape[0] * v.shape[1])

    def group_norm(v, gamma, beta):         # GroupNorm(1, C): biased variance
        mu = full_mean(v)
        var = full_mean(jnp.square(v - mu))
        return (v - mu) * jax.lax.rsqrt(var + eps) * gamma + beta

    # ---- Conv1d #1: taps folded into the contraction dim -------------------
    patch1 = jnp.concatenate(
        [xp_ref[0, :, pl.ds(k, L)] for k in range(3)], axis=0)     # (3Cin, L)
    h = jnp.dot(w1_ref[...], patch1, preferred_element_type=jnp.float32)
    h = h + b1_ref[...]

    # ---- GroupNorm(1, C) + LeakyReLU(0.2) ----------------------------------
    h = group_norm(h, g1_ref[...], be1_ref[...])
    h = jnp.where(h >= 0.0, h, slope * h)

    # ---- Conv1d #2: park h at an aligned lane offset in zeroed scratch -----
    hbuf[...] = jnp.zeros_like(hbuf)
    hbuf[:, pl.ds(_OFF, L)] = h
    patch2 = jnp.concatenate(
        [hbuf[:, pl.ds(_OFF - 1 + k, L)] for k in range(3)], axis=0)  # (3C, L)
    h2 = jnp.dot(w2_ref[...], patch2, preferred_element_type=jnp.float32)
    h2 = h2 + b2_ref[...]

    # ---- GroupNorm(1, C) + residual add ------------------------------------
    h2 = group_norm(h2, g2_ref[...], be2_ref[...])
    x = xp_ref[0, :, pl.ds(1, L)]
    o_ref[0] = (x + h2).astype(o_ref.dtype)


def residual_block1d(x, params, *, negative_slope=0.2, eps=1e-5):
    """x: (N, C, L) float32 in PyTorch Conv1d (NCL) layout. Returns (N, C, L)."""
    N, Cin, L = x.shape
    w1, b1, g1, be1 = params["w1"], params["b1"], params["g1"], params["beta1"]
    w2, b2, g2, be2 = params["w2"], params["b2"], params["g2"], params["beta2"]
    Cout = w1.shape[0]
    assert w1.shape == (Cout, Cin, 3) and w2.shape == (Cout, Cout, 3)
    assert Cin == Cout, "residual add requires in_features == out_features"
    C = Cout

    # Fold the 3 taps into the contraction dim once, outside the kernel:
    #   w_fold[o, k*Cin + c] = w[o, c, k]
    w1f = jnp.transpose(w1, (0, 2, 1)).reshape(C, 3 * Cin)
    w2f = jnp.transpose(w2, (0, 2, 1)).reshape(C, 3 * C)
    xp = jnp.pad(x.astype(jnp.float32), ((0, 0), (0, 0), (1, 1)))

    col = lambda v: v.reshape(C, 1).astype(jnp.float32)
    vec_spec = pl.BlockSpec((C, 1), lambda n: (0, 0))

    kernel = functools.partial(_resblock_kernel, eps=eps, slope=negative_slope)
    return pl.pallas_call(
        kernel,
        out_shape=jax.ShapeDtypeStruct((N, C, L), jnp.float32),
        grid=(N,),
        in_specs=[
            pl.BlockSpec((1, Cin, L + 2), lambda n: (n, 0, 0)),
            pl.BlockSpec((C, 3 * Cin), lambda n: (0, 0)),
            vec_spec, vec_spec, vec_spec,
            pl.BlockSpec((C, 3 * C), lambda n: (0, 0)),
            vec_spec, vec_spec, vec_spec,
        ],
        out_specs=pl.BlockSpec((1, C, L), lambda n: (n, 0, 0)),
        scratch_shapes=[pltpu.VMEM((C, L + 2 * _OFF), jnp.float32)],
        compiler_params=pltpu.CompilerParams(
            dimension_semantics=("parallel",)),
    )(xp, w1f, col(b1), col(g1), col(be1), w2f, col(b2), col(g2), col(be2))


# ----------------------------------------------------------------------------
# Pure-JAX reference (mirrors the PyTorch module) for a correctness check.
# ----------------------------------------------------------------------------
def _reference(x, params, *, negative_slope=0.2, eps=1e-5):
    def conv1d(h, w, b):
        L = h.shape[-1]
        hp = jnp.pad(h, ((0, 0), (0, 0), (1, 1)))
        out = sum(
            jnp.einsum("ncl,oc->nol", hp[:, :, k:k + L], w[:, :, k],
                       precision=jax.lax.Precision.HIGHEST)
            for k in range(3))
        return out + b[None, :, None]

    def gn(h, gamma, beta):
        mu = jnp.mean(h, axis=(1, 2), keepdims=True)
        var = jnp.mean(jnp.square(h - mu), axis=(1, 2), keepdims=True)
        return ((h - mu) * jax.lax.rsqrt(var + eps)
                * gamma[None, :, None] + beta[None, :, None])

    h = conv1d(x, params["w1"], params["b1"])
    h = gn(h, params["g1"], params["beta1"])
    h = jnp.where(h >= 0.0, h, negative_slope * h)
    h = conv1d(h, params["w2"], params["b2"])
    h = gn(h, params["g2"], params["beta2"])
    return x + h


# ----------------------------------------------------------------------------
if __name__ == "__main__":
    N, C, L = 2, 32, 128   # small, but L=128 keeps output stores lane-dense
    key = jax.random.PRNGKey(0)
    ks = jax.random.split(key, 9)
    x = jax.random.normal(ks[0], (N, C, L), jnp.float32)
    params = {
        "w1": 0.05 * jax.random.normal(ks[1], (C, C, 3), jnp.float32),
        "b1": 0.05 * jax.random.normal(ks[2], (C,), jnp.float32),
        "g1": 1.0 + 0.1 * jax.random.normal(ks[3], (C,), jnp.float32),
        "beta1": 0.1 * jax.random.normal(ks[4], (C,), jnp.float32),
        "w2": 0.05 * jax.random.normal(ks[5], (C, C, 3), jnp.float32),
        "b2": 0.05 * jax.random.normal(ks[6], (C,), jnp.float32),
        "g2": 1.0 + 0.1 * jax.random.normal(ks[7], (C,), jnp.float32),
        "beta2": 0.1 * jax.random.normal(ks[8], (C,), jnp.float32),
    }

    fwd = jax.jit(functools.partial(residual_block1d, negative_slope=0.2))
    out = fwd(x, params)
    jax.block_until_ready(out)

    ref = _reference(x, params, negative_slope=0.2)
    err = float(jnp.max(jnp.abs(out - ref)))
    assert out.shape == (N, C, L), out.shape
    assert bool(jnp.all(jnp.isfinite(out)))
    # 5e-2 tolerance covers MXU f32-emulation pass differences vs. the HIGHEST-
    # precision XLA reference; real indexing/normalization bugs are O(0.1-1).
    assert err < 5e-2, f"max abs error vs reference: {err}"
    print("KERNEL_OK")
</pallas_src>

<mosaic_0001>
module attributes {stable_mosaic.version = 11 : i64} {
  func.func @_resblock_kernel(%arg0: i32, %arg1: memref<1x32x130xf32, #tpu.memory_space<vmem>>, %arg2: memref<32x96xf32, #tpu.memory_space<vmem>>, %arg3: memref<32x1xf32, #tpu.memory_space<vmem>>, %arg4: memref<32x1xf32, #tpu.memory_space<vmem>>, %arg5: memref<32x1xf32, #tpu.memory_space<vmem>>, %arg6: memref<32x96xf32, #tpu.memory_space<vmem>>, %arg7: memref<32x1xf32, #tpu.memory_space<vmem>>, %arg8: memref<32x1xf32, #tpu.memory_space<vmem>>, %arg9: memref<32x1xf32, #tpu.memory_space<vmem>>, %arg10: memref<1x32x128xf32, #tpu.memory_space<vmem>>, %arg11: memref<32x384xf32, #tpu.memory_space<vmem>>) attributes {dimension_semantics = [#tpu.dimension_semantics<parallel>], iteration_bounds = array<i64: 2>, scalar_prefetch = 0 : i64, scratch_operands = 1 : i64, tpu.core_type = #tpu.core_type<tc>, window_params = [{transform_indices = @transform_0, window_bounds = array<i64: 1, 32, 130>}, {pipeline_mode = #tpu.pipeline_mode<synchronous>, transform_indices = @transform_1, window_bounds = array<i64: 32, 96>}, {pipeline_mode = #tpu.pipeline_mode<synchronous>, transform_indices = @transform_2, window_bounds = array<i64: 32, 1>}, {pipeline_mode = #tpu.pipeline_mode<synchronous>, transform_indices = @transform_3, window_bounds = array<i64: 32, 1>}, {pipeline_mode = #tpu.pipeline_mode<synchronous>, transform_indices = @transform_4, window_bounds = array<i64: 32, 1>}, {pipeline_mode = #tpu.pipeline_mode<synchronous>, transform_indices = @transform_5, window_bounds = array<i64: 32, 96>}, {pipeline_mode = #tpu.pipeline_mode<synchronous>, transform_indices = @transform_6, window_bounds = array<i64: 32, 1>}, {pipeline_mode = #tpu.pipeline_mode<synchronous>, transform_indices = @transform_7, window_bounds = array<i64: 32, 1>}, {pipeline_mode = #tpu.pipeline_mode<synchronous>, transform_indices = @transform_8, window_bounds = array<i64: 32, 1>}, {transform_indices = @transform_9, window_bounds = array<i64: 1, 32, 128>}]} {
    %c0 = arith.constant 0 : index
    %c0_0 = arith.constant 0 : index
    %c0_1 = arith.constant 0 : index
    %0 = vector.load %arg1[%c0, %c0_0, %c0_1] : memref<1x32x130xf32, #tpu.memory_space<vmem>>, vector<1x32x128xf32>
    %1 = vector.shape_cast %0 : vector<1x32x128xf32> to vector<32x128xf32>
    %c0_2 = arith.constant 0 : index
    %c0_3 = arith.constant 0 : index
    %c1 = arith.constant 1 : index
    %2 = vector.load %arg1[%c0_2, %c0_3, %c1] : memref<1x32x130xf32, #tpu.memory_space<vmem>>, vector<1x32x128xf32>
    %3 = vector.shape_cast %2 : vector<1x32x128xf32> to vector<32x128xf32>
    %c0_4 = arith.constant 0 : index
    %c0_5 = arith.constant 0 : index
    %c2 = arith.constant 2 : index
    %4 = vector.load %arg1[%c0_4, %c0_5, %c2] : memref<1x32x130xf32, #tpu.memory_space<vmem>>, vector<1x32x128xf32>
    %5 = vector.shape_cast %4 : vector<1x32x128xf32> to vector<32x128xf32>
    %6 = tpu.concatenate %1, %3, %5 in 0 : vector<32x128xf32>, vector<32x128xf32>, vector<32x128xf32> -> vector<96x128xf32>
    %c0_6 = arith.constant 0 : index
    %c0_7 = arith.constant 0 : index
    %7 = vector.load %arg2[%c0_6, %c0_7] : memref<32x96xf32, #tpu.memory_space<vmem>>, vector<32x96xf32>
    %cst = arith.constant dense<0.000000e+00> : vector<32x128xf32>
    %8 = tpu.matmul %7, %6, %cst {dimension_numbers = #tpu.dot_dimension_numbers<[1], [0], [0], [1], [0, 0, 1, 1], [], []>} : vector<32x96xf32>, vector<96x128xf32>, vector<32x128xf32> -> vector<32x128xf32>
    %c0_8 = arith.constant 0 : index
    %c0_9 = arith.constant 0 : index
    %9 = vector.load %arg3[%c0_8, %c0_9] : memref<32x1xf32, #tpu.memory_space<vmem>>, vector<32x1xf32>
    %10 = vector.broadcast %9 : vector<32x1xf32> to vector<32x128xf32>
    %11 = arith.addf %8, %10 : vector<32x128xf32>
    %c0_10 = arith.constant 0 : index
    %c0_11 = arith.constant 0 : index
    %12 = vector.load %arg4[%c0_10, %c0_11] : memref<32x1xf32, #tpu.memory_space<vmem>>, vector<32x1xf32>
    %c0_12 = arith.constant 0 : index
    %c0_13 = arith.constant 0 : index
    %13 = vector.load %arg5[%c0_12, %c0_13] : memref<32x1xf32, #tpu.memory_space<vmem>>, vector<32x1xf32>
    %cst_14 = arith.constant dense<0.000000e+00> : vector<32xf32>
    %14 = vector.multi_reduction <add>, %11, %cst_14 [1] : vector<32x128xf32> to vector<32xf32>
    %15 = vector.shape_cast %14 : vector<32xf32> to vector<32x1xf32>
    %cst_15 = arith.constant dense<0.000000e+00> : vector<1xf32>
    %16 = vector.multi_reduction <add>, %15, %cst_15 [0] : vector<32x1xf32> to vector<1xf32>
    %17 = vector.shape_cast %16 : vector<1xf32> to vector<1x1xf32>
    %cst_16 = arith.constant 4.096000e+03 : f32
    %18 = vector.broadcast %cst_16 : f32 to vector<1x1xf32>
    %19 = arith.divf %17, %18 : vector<1x1xf32>
    %20 = vector.broadcast %19 : vector<1x1xf32> to vector<32x128xf32>
    %21 = arith.subf %11, %20 : vector<32x128xf32>
    %22 = arith.mulf %21, %21 : vector<32x128xf32>
    %cst_17 = arith.constant dense<0.000000e+00> : vector<32xf32>
    %23 = vector.multi_reduction <add>, %22, %cst_17 [1] : vector<32x128xf32> to vector<32xf32>
    %24 = vector.shape_cast %23 : vector<32xf32> to vector<32x1xf32>
    %cst_18 = arith.constant dense<0.000000e+00> : vector<1xf32>
    %25 = vector.multi_reduction <add>, %24, %cst_18 [0] : vector<32x1xf32> to vector<1xf32>
    %26 = vector.shape_cast %25 : vector<1xf32> to vector<1x1xf32>
    %cst_19 = arith.constant 4.096000e+03 : f32
    %27 = vector.broadcast %cst_19 : f32 to vector<1x1xf32>
    %28 = arith.divf %26, %27 : vector<1x1xf32>
    %29 = vector.broadcast %19 : vector<1x1xf32> to vector<32x128xf32>
    %30 = arith.subf %11, %29 : vector<32x128xf32>
    %cst_20 = arith.constant 9.99999974E-6 : f32
    %31 = vector.broadcast %cst_20 : f32 to vector<1x1xf32>
    %32 = arith.addf %28, %31 : vector<1x1xf32>
    %33 = math.rsqrt %32 : vector<1x1xf32>
    %34 = vector.broadcast %33 : vector<1x1xf32> to vector<32x128xf32>
    %35 = arith.mulf %30, %34 : vector<32x128xf32>
    %36 = vector.broadcast %12 : vector<32x1xf32> to vector<32x128xf32>
    %37 = arith.mulf %35, %36 : vector<32x128xf32>
    %38 = vector.broadcast %13 : vector<32x1xf32> to vector<32x128xf32>
    %39 = arith.addf %37, %38 : vector<32x128xf32>
    %cst_21 = arith.constant 0.000000e+00 : f32
    %40 = vector.broadcast %cst_21 : f32 to vector<32x128xf32>
    %41 = arith.cmpf oge, %39, %40 : vector<32x128xf32>
    %cst_22 = arith.constant 2.000000e-01 : f32
    %42 = vector.broadcast %cst_22 : f32 to vector<32x128xf32>
    %43 = arith.mulf %42, %39 : vector<32x128xf32>
    %44 = arith.select %41, %39, %43 : vector<32x128xi1>, vector<32x128xf32>
    %cst_23 = arith.constant 0.000000e+00 : f32
    %45 = vector.broadcast %cst_23 : f32 to vector<32x384xf32>
    %c0_24 = arith.constant 0 : index
    %c0_25 = arith.constant 0 : index
    %46 = vector.load %arg11[%c0_24, %c0_25] : memref<32x384xf32, #tpu.memory_space<vmem>>, vector<32x384xf32>
    tpu.vector_store %arg11[%c0_24, %c0_25], %45 {strides = array<i32>} : memref<32x384xf32, #tpu.memory_space<vmem>>, vector<32x384xf32>,
    %c0_26 = arith.constant 0 : index
    %c128 = arith.constant 128 : index
    %47 = vector.load %arg11[%c0_26, %c128] : memref<32x384xf32, #tpu.memory_space<vmem>>, vector<32x128xf32>
    tpu.vector_store %arg11[%c0_26, %c128], %44 {strides = array<i32>} : memref<32x384xf32, #tpu.memory_space<vmem>>, vector<32x128xf32>,
    %c0_27 = arith.constant 0 : index
    %c127 = arith.constant 127 : index
    %48 = vector.load %arg11[%c0_27, %c127] : memref<32x384xf32, #tpu.memory_space<vmem>>, vector<32x128xf32>
    %c0_28 = arith.constant 0 : index
    %c128_29 = arith.constant 128 : index
    %49 = vector.load %arg11[%c0_28, %c128_29] : memref<32x384xf32, #tpu.memory_space<vmem>>, vector<32x128xf32>
    %c0_30 = arith.constant 0 : index
    %c129 = arith.constant 129 : index
    %50 = vector.load %arg11[%c0_30, %c129] : memref<32x384xf32, #tpu.memory_space<vmem>>, vector<32x128xf32>
    %51 = tpu.concatenate %48, %49, %50 in 0 : vector<32x128xf32>, vector<32x128xf32>, vector<32x128xf32> -> vector<96x128xf32>
    %c0_31 = arith.constant 0 : index
    %c0_32 = arith.constant 0 : index
    %52 = vector.load %arg6[%c0_31, %c0_32] : memref<32x96xf32, #tpu.memory_space<vmem>>, vector<32x96xf32>
    %cst_33 = arith.constant dense<0.000000e+00> : vector<32x128xf32>
    %53 = tpu.matmul %52, %51, %cst_33 {dimension_numbers = #tpu.dot_dimension_numbers<[1], [0], [0], [1], [0, 0, 1, 1], [], []>} : vector<32x96xf32>, vector<96x128xf32>, vector<32x128xf32> -> vector<32x128xf32>
    %c0_34 = arith.constant 0 : index
    %c0_35 = arith.constant 0 : index
    %54 = vector.load %arg7[%c0_34, %c0_35] : memref<32x1xf32, #tpu.memory_space<vmem>>, vector<32x1xf32>
    %55 = vector.broadcast %54 : vector<32x1xf32> to vector<32x128xf32>
    %56 = arith.addf %53, %55 : vector<32x128xf32>
    %c0_36 = arith.constant 0 : index
    %c0_37 = arith.constant 0 : index
    %57 = vector.load %arg8[%c0_36, %c0_37] : memref<32x1xf32, #tpu.memory_space<vmem>>, vector<32x1xf32>
    %c0_38 = arith.constant 0 : index
    %c0_39 = arith.constant 0 : index
    %58 = vector.load %arg9[%c0_38, %c0_39] : memref<32x1xf32, #tpu.memory_space<vmem>>, vector<32x1xf32>
    %cst_40 = arith.constant dense<0.000000e+00> : vector<32xf32>
    %59 = vector.multi_reduction <add>, %56, %cst_40 [1] : vector<32x128xf32> to vector<32xf32>
    %60 = vector.shape_cast %59 : vector<32xf32> to vector<32x1xf32>
    %cst_41 = arith.constant dense<0.000000e+00> : vector<1xf32>
    %61 = vector.multi_reduction <add>, %60, %cst_41 [0] : vector<32x1xf32> to vector<1xf32>
    %62 = vector.shape_cast %61 : vector<1xf32> to vector<1x1xf32>
    %cst_42 = arith.constant 4.096000e+03 : f32
    %63 = vector.broadcast %cst_42 : f32 to vector<1x1xf32>
    %64 = arith.divf %62, %63 : vector<1x1xf32>
    %65 = vector.broadcast %64 : vector<1x1xf32> to vector<32x128xf32>
    %66 = arith.subf %56, %65 : vector<32x128xf32>
    %67 = arith.mulf %66, %66 : vector<32x128xf32>
    %cst_43 = arith.constant dense<0.000000e+00> : vector<32xf32>
    %68 = vector.multi_reduction <add>, %67, %cst_43 [1] : vector<32x128xf32> to vector<32xf32>
    %69 = vector.shape_cast %68 : vector<32xf32> to vector<32x1xf32>
    %cst_44 = arith.constant dense<0.000000e+00> : vector<1xf32>
    %70 = vector.multi_reduction <add>, %69, %cst_44 [0] : vector<32x1xf32> to vector<1xf32>
    %71 = vector.shape_cast %70 : vector<1xf32> to vector<1x1xf32>
    %cst_45 = arith.constant 4.096000e+03 : f32
    %72 = vector.broadcast %cst_45 : f32 to vector<1x1xf32>
    %73 = arith.divf %71, %72 : vector<1x1xf32>
    %74 = vector.broadcast %64 : vector<1x1xf32> to vector<32x128xf32>
    %75 = arith.subf %56, %74 : vector<32x128xf32>
    %cst_46 = arith.constant 9.99999974E-6 : f32
    %76 = vector.broadcast %cst_46 : f32 to vector<1x1xf32>
    %77 = arith.addf %73, %76 : vector<1x1xf32>
    %78 = math.rsqrt %77 : vector<1x1xf32>
    %79 = vector.broadcast %78 : vector<1x1xf32> to vector<32x128xf32>
    %80 = arith.mulf %75, %79 : vector<32x128xf32>
    %81 = vector.broadcast %57 : vector<32x1xf32> to vector<32x128xf32>
    %82 = arith.mulf %80, %81 : vector<32x128xf32>
    %83 = vector.broadcast %58 : vector<32x1xf32> to vector<32x128xf32>
    %84 = arith.addf %82, %83 : vector<32x128xf32>
    %c0_47 = arith.constant 0 : index
    %c0_48 = arith.constant 0 : index
    %c1_49 = arith.constant 1 : index
    %85 = vector.load %arg1[%c0_47, %c0_48, %c1_49] : memref<1x32x130xf32, #tpu.memory_space<vmem>>, vector<1x32x128xf32>
    %86 = vector.shape_cast %85 : vector<1x32x128xf32> to vector<32x128xf32>
    %87 = arith.addf %86, %84 : vector<32x128xf32>
    %c0_50 = arith.constant 0 : index
    %c0_51 = arith.constant 0 : index
    %c0_52 = arith.constant 0 : index
    %88 = vector.load %arg10[%c0_50, %c0_51, %c0_52] : memref<1x32x128xf32, #tpu.memory_space<vmem>>, vector<1x32x128xf32>
    %89 = vector.shape_cast %88 : vector<1x32x128xf32> to vector<32x128xf32>
    %90 = vector.shape_cast %87 : vector<32x128xf32> to vector<1x32x128xf32>
    tpu.vector_store %arg10[%c0_50, %c0_51, %c0_52], %90 {strides = array<i32>} : memref<1x32x128xf32, #tpu.memory_space<vmem>>, vector<1x32x128xf32>,
    return
  }
  func.func @transform_0(%arg0: i32) -> (i32, i32, i32) {
    %c0_i32 = arith.constant 0 : i32
    %c0_i32_0 = arith.constant 0 : i32
    %c0_i32_1 = arith.constant 0 : i32
    return %arg0, %c0_i32, %c0_i32_0 : i32, i32, i32
  }
  func.func @transform_1(%arg0: i32) -> (i32, i32) {
    %c0_i32 = arith.constant 0 : i32
    %c0_i32_0 = arith.constant 0 : i32
    %c0_i32_1 = arith.constant 0 : i32
    return %c0_i32, %c0_i32_0 : i32, i32
  }
  func.func @transform_2(%arg0: i32) -> (i32, i32) {
    %c0_i32 = arith.constant 0 : i32
    %c0_i32_0 = arith.constant 0 : i32
    %c0_i32_1 = arith.constant 0 : i32
    return %c0_i32, %c0_i32_0 : i32, i32
  }
  func.func @transform_3(%arg0: i32) -> (i32, i32) {
    %c0_i32 = arith.constant 0 : i32
    %c0_i32_0 = arith.constant 0 : i32
    %c0_i32_1 = arith.constant 0 : i32
    return %c0_i32, %c0_i32_0 : i32, i32
  }
  func.func @transform_4(%arg0: i32) -> (i32, i32) {
    %c0_i32 = arith.constant 0 : i32
    %c0_i32_0 = arith.constant 0 : i32
    %c0_i32_1 = arith.constant 0 : i32
    return %c0_i32, %c0_i32_0 : i32, i32
  }
  func.func @transform_5(%arg0: i32) -> (i32, i32) {
    %c0_i32 = arith.constant 0 : i32
    %c0_i32_0 = arith.constant 0 : i32
    %c0_i32_1 = arith.constant 0 : i32
    return %c0_i32, %c0_i32_0 : i32, i32
  }
  func.func @transform_6(%arg0: i32) -> (i32, i32) {
    %c0_i32 = arith.constant 0 : i32
    %c0_i32_0 = arith.constant 0 : i32
    %c0_i32_1 = arith.constant 0 : i32
    return %c0_i32, %c0_i32_0 : i32, i32
  }
  func.func @transform_7(%arg0: i32) -> (i32, i32) {
    %c0_i32 = arith.constant 0 : i32
    %c0_i32_0 = arith.constant 0 : i32
    %c0_i32_1 = arith.constant 0 : i32
    return %c0_i32, %c0_i32_0 : i32, i32
  }
  func.func @transform_8(%arg0: i32) -> (i32, i32) {
    %c0_i32 = arith.constant 0 : i32
    %c0_i32_0 = arith.constant 0 : i32
    %c0_i32_1 = arith.constant 0 : i32
    return %c0_i32, %c0_i32_0 : i32, i32
  }
  func.func @transform_9(%arg0: i32) -> (i32, i32, i32) {
    %c0_i32 = arith.constant 0 : i32
    %c0_i32_0 = arith.constant 0 : i32
    %c0_i32_1 = arith.constant 0 : i32
    return %arg0, %c0_i32, %c0_i32_0 : i32, i32, i32
  }
}

</mosaic_0001>

<llo_original>
// kernel: residual_block1d.1
$region0: #{residual_block1d.1}
  #allocation0 [shape = 'u32[]', space=smem, size = 0x4, offset = 0x4, fixed_abs, tag = 'smem constant byte address 0x4 - core index']
  #allocation1 [shape = 'u32[144,128]{1,0:T(1,128)}', space=vmem, size = 0x12000, scoped, tag = 'internal scratch']
  #allocation2 [shape = 'f32[32,384]{1,0:T(8,128)}', space=vmem, size = 0xc000, scoped, tag = 'scratch operand']
  %s0 = inlined_call_operand.vmem [shape: f32[2,32,130], index: 0, kind: input, shape index: {}]
  %s1 = inlined_call_operand.vmem [shape: f32[32,96], index: 1, kind: input, shape index: {}]
  %s2 = inlined_call_operand.vmem [shape: f32[32,1], index: 2, kind: input, shape index: {}]
  %s3 = inlined_call_operand.vmem [shape: f32[32,1], index: 3, kind: input, shape index: {}]
  %s4 = inlined_call_operand.vmem [shape: f32[32,1], index: 4, kind: input, shape index: {}]
  %s5 = inlined_call_operand.vmem [shape: f32[32,96], index: 5, kind: input, shape index: {}]
  %s6 = inlined_call_operand.vmem [shape: f32[32,1], index: 6, kind: input, shape index: {}]
  %s7 = inlined_call_operand.vmem [shape: f32[32,1], index: 7, kind: input, shape index: {}]
  %s8 = inlined_call_operand.vmem [shape: f32[32,1], index: 8, kind: input, shape index: {}]
  %s9 = inlined_call_operand.hbm [shape: f32[2,32,128], index: 9, kind: output, shape index: {}]
  %s10 = sld [smem:[#allocation0]]
  $region69: #{residual_block1d.1} parent=0
    _
  %s12 = ssub.s32 1, %s10
  %s13 = scalar_select 0, %s12, %s10
  $region1: #{residual_block1d.1} parent=0
    #allocation3 [shape = 'u8[32768]{0}', space=vmem, size = 0x8000, scoped, tag = 'output window, operand 0']
    #allocation4 [shape = 's32[2]{0}', space=sflag, size = 0x8, scoped, tag = 'scoped memory for residual_block1d.1']
    %14 = vsyncpa [#allocation4], 0
    %s15 = scalar_lea.sflag [#allocation4], 1
    %16 = vsyncpa %s15, 0
    loop: start=0, step=1, limit=4
    $region2: #{residual_block1d.1} parent=1 // loop_pre_header
      _
    $region3: #{residual_block1d.1} parent=1 // loop_header
      %s18 = sphi 0, %s22
      %p19 = scmp.ge.s32.totalorder %s18, 4
      %s28 = sphi 0, %s30
      %s31 = sphi 0, %s28
      %s32 = sphi 0, %s31
      %s48 = sphi 0, %s32
      %s52 = sphi 0, %s52
      %s54 = sphi 0, %s52
      %s55 = sphi 0, %s54
      %s69 = sphi 0, %s55
      %s73 = sphi 0, %s73
      %s75 = sphi 0, %s73
      %s76 = sphi 0, %s75
      %s90 = sphi 0, %s76
      %s94 = sphi 0, %s94
      %s96 = sphi 0, %s94
      %s97 = sphi 0, %s96
      %s111 = sphi 0, %s97
      %s115 = sphi 0, %s115
      %s117 = sphi 0, %s115
      %s118 = sphi 0, %s117
      %s132 = sphi 0, %s118
      %s136 = sphi 0, %s136
      %s138 = sphi 0, %s136
      %s139 = sphi 0, %s138
      %s153 = sphi 0, %s139
      %s157 = sphi 0, %s157
      %s159 = sphi 0, %s157
      %s160 = sphi 0, %s159
      %s174 = sphi 0, %s160
      %s178 = sphi 0, %s178
      %s180 = sphi 0, %s178
      %s181 = sphi 0, %s180
      %s195 = sphi 0, %s181
      %s199 = sphi 0, %s199
      %s201 = sphi 0, %s199
      %s202 = sphi 0, %s201
      %s216 = sphi 0, %s202
      %s222 = sphi 0, %s224
      %s225 = sphi 0, %s222
      %s226 = sphi 0, %s225
      %s242 = sphi 0, %s226
    $region4: #{residual_block1d.1} parent=1 // loop_header_branch
      %21 = sbr.rel (%p19) target = $region8
    $region5: #{residual_block1d.1} parent=1 // loop_body
      %s23 = ssub.s32 %s18, 1
      %s24 = ssub.s32 %s18, 2
      %s25 = sadd.s32 %s18, 1
      %s26 = ssub.s32 %s18, %s25
      %p27 = scmp.eq.s32.totalorder %s26, 0
      %s29 = sadd.s32 %s28, 1
      %s30 = scalar_select %p27, %s28, %s29
      %p33 = pneg %p27
      %p34 = scmp.eq.s32.totalorder %s18, 1
      %p35 = por %p33, %p34
      %p36 = scmp.ne.s32.totalorder %s28, %s31
      %p37 = scmp.eq.s32.totalorder %s18, 0
      %p38 = por %p36, %p37
      %p39 = scmp.ne.s32.totalorder %s28, %s31
      %p40 = scmp.eq.s32.totalorder %s23, 1
      %p41 = por %p39, %p40
      %p42 = scmp.ne.s32.totalorder %s31, %s32
      %p43 = scmp.eq.s32.totalorder %s23, 0
      %p44 = por %p42, %p43
      %p45 = scmp.ne.s32.totalorder %s31, %s32
      %p46 = scmp.eq.s32.totalorder %s24, 1
      %p47 = por %p45, %p46
      %p49 = scmp.ne.s32.totalorder %s32, %s48
      %p50 = scmp.eq.s32.totalorder %s24, 0
      %p51 = por %p49, %p50
      %s53 = sadd.s32 %s52, 1
      %p56 = scmp.eq.s32.totalorder %s18, 1
      %p57 = scmp.ne.s32.totalorder %s52, %s54
      %p58 = scmp.eq.s32.totalorder %s18, 0
      %p59 = por %p57, %p58
      %p60 = scmp.ne.s32.totalorder %s52, %s54
      %p61 = scmp.eq.s32.totalorder %s23, 1
      %p62 = por %p60, %p61
      %p63 = scmp.ne.s32.totalorder %s54, %s55
      %p64 = scmp.eq.s32.totalorder %s23, 0
      %p65 = por %p63, %p64
      %p66 = scmp.ne.s32.totalorder %s54, %s55
      %p67 = scmp.eq.s32.totalorder %s24, 1
      %p68 = por %p66, %p67
      %p70 = scmp.ne.s32.totalorder %s55, %s69
      %p71 = scmp.eq.s32.totalorder %s24, 0
      %p72 = por %p70, %p71
      %s74 = sadd.s32 %s73, 1
      %p77 = scmp.eq.s32.totalorder %s18, 1
      %p78 = scmp.ne.s32.totalorder %s73, %s75
      %p79 = scmp.eq.s32.totalorder %s18, 0
      %p80 = por %p78, %p79
      %p81 = scmp.ne.s32.totalorder %s73, %s75
      %p82 = scmp.eq.s32.totalorder %s23, 1
      %p83 = por %p81, %p82
      %p84 = scmp.ne.s32.totalorder %s75, %s76
      %p85 = scmp.eq.s32.totalorder %s23, 0
      %p86 = por %p84, %p85
      %p87 = scmp.ne.s32.totalorder %s75, %s76
      %p88 = scmp.eq.s32.totalorder %s24, 1
      %p89 = por %p87, %p88
      %p91 = scmp.ne.s32.totalorder %s76, %s90
      %p92 = scmp.eq.s32.totalorder %s24, 0
      %p93 = por %p91, %p92
      %s95 = sadd.s32 %s94, 1
      %p98 = scmp.eq.s32.totalorder %s18, 1
      %p99 = scmp.ne.s32.totalorder %s94, %s96
      %p100 = scmp.eq.s32.totalorder %s18, 0
      %p101 = por %p99, %p100
      %p102 = scmp.ne.s32.totalorder %s94, %s96
      %p103 = scmp.eq.s32.totalorder %s23, 1
      %p104 = por %p102, %p103
      %p105 = scmp.ne.s32.totalorder %s96, %s97
      %p106 = scmp.eq.s32.totalorder %s23, 0
      %p107 = por %p105, %p106
      %p108 = scmp.ne.s32.totalorder %s96, %s97
      %p109 = scmp.eq.s32.totalorder %s24, 1
      %p110 = por %p108, %p109
      %p112 = scmp.ne.s32.totalorder %s97, %s111
      %p113 = scmp.eq.s32.totalorder %s24, 0
      %p114 = por %p112, %p113
      %s116 = sadd.s32 %s115, 1
      %p119 = scmp.eq.s32.totalorder %s18, 1
      %p120 = scmp.ne.s32.totalorder %s115, %s117
      %p121 = scmp.eq.s32.totalorder %s18, 0
      %p122 = por %p120, %p121
      %p123 = scmp.ne.s32.totalorder %s115, %s117
      %p124 = scmp.eq.s32.totalorder %s23, 1
      %p125 = por %p123, %p124
      %p126 = scmp.ne.s32.totalorder %s117, %s118
      %p127 = scmp.eq.s32.totalorder %s23, 0
      %p128 = por %p126, %p127
      %p129 = scmp.ne.s32.totalorder %s117, %s118
      %p130 = scmp.eq.s32.totalorder %s24, 1
      %p131 = por %p129, %p130
      %p133 = scmp.ne.s32.totalorder %s118, %s132
      %p134 = scmp.eq.s32.totalorder %s24, 0
      %p135 = por %p133, %p134
      %s137 = sadd.s32 %s136, 1
      %p140 = scmp.eq.s32.totalorder %s18, 1
      %p141 = scmp.ne.s32.totalorder %s136, %s138
      %p142 = scmp.eq.s32.totalorder %s18, 0
      %p143 = por %p141, %p142
      %p144 = scmp.ne.s32.totalorder %s136, %s138
      %p145 = scmp.eq.s32.totalorder %s23, 1
      %p146 = por %p144, %p145
      %p147 = scmp.ne.s32.totalorder %s138, %s139
      %p148 = scmp.eq.s32.totalorder %s23, 0
      %p149 = por %p147, %p148
      %p150 = scmp.ne.s32.totalorder %s138, %s139
      %p151 = scmp.eq.s32.totalorder %s24, 1
      %p152 = por %p150, %p151
      %p154 = scmp.ne.s32.totalorder %s139, %s153
      %p155 = scmp.eq.s32.totalorder %s24, 0
      %p156 = por %p154, %p155
      %s158 = sadd.s32 %s157, 1
      %p161 = scmp.eq.s32.totalorder %s18, 1
      %p162 = scmp.ne.s32.totalorder %s157, %s159
      %p163 = scmp.eq.s32.totalorder %s18, 0
      %p164 = por %p162, %p163
      %p165 = scmp.ne.s32.totalorder %s157, %s159
      %p166 = scmp.eq.s32.totalorder %s23, 1
      %p167 = por %p165, %p166
      %p168 = scmp.ne.s32.totalorder %s159, %s160
      %p169 = scmp.eq.s32.totalorder %s23, 0
      %p170 = por %p168, %p169
      %p171 = scmp.ne.s32.totalorder %s159, %s160
      %p172 = scmp.eq.s32.totalorder %s24, 1
      %p173 = por %p171, %p172
      %p175 = scmp.ne.s32.totalorder %s160, %s174
      %p176 = scmp.eq.s32.totalorder %s24, 0
      %p177 = por %p175, %p176
      %s179 = sadd.s32 %s178, 1
      %p182 = scmp.eq.s32.totalorder %s18, 1
      %p183 = scmp.ne.s32.totalorder %s178, %s180
      %p184 = scmp.eq.s32.totalorder %s18, 0
      %p185 = por %p183, %p184
      %p186 = scmp.ne.s32.totalorder %s178, %s180
      %p187 = scmp.eq.s32.totalorder %s23, 1
      %p188 = por %p186, %p187
      %p189 = scmp.ne.s32.totalorder %s180, %s181
      %p190 = scmp.eq.s32.totalorder %s23, 0
      %p191 = por %p189, %p190
      %p192 = scmp.ne.s32.totalorder %s180, %s181
      %p193 = scmp.eq.s32.totalorder %s24, 1
      %p194 = por %p192, %p193
      %p196 = scmp.ne.s32.totalorder %s181, %s195
      %p197 = scmp.eq.s32.totalorder %s24, 0
      %p198 = por %p196, %p197
      %s200 = sadd.s32 %s199, 1
      %p203 = scmp.eq.s32.totalorder %s18, 1
      %p204 = scmp.ne.s32.totalorder %s199, %s201
      %p205 = scmp.eq.s32.totalorder %s18, 0
      %p206 = por %p204, %p205
      %p207 = scmp.ne.s32.totalorder %s199, %s201
      %p208 = scmp.eq.s32.totalorder %s23, 1
      %p209 = por %p207, %p208
      %p210 = scmp.ne.s32.totalorder %s201, %s202
      %p211 = scmp.eq.s32.totalorder %s23, 0
      %p212 = por %p210, %p211
      %p213 = scmp.ne.s32.totalorder %s201, %s202
      %p214 = scmp.eq.s32.totalorder %s24, 1
      %p215 = por %p213, %p214
      %p217 = scmp.ne.s32.totalorder %s202, %s216
      %p218 = scmp.eq.s32.totalorder %s24, 0
      %p219 = por %p217, %p218
      %s220 = ssub.s32 %s18, %s25
      %p221 = scmp.eq.s32.totalorder %s220, 0
      %s223 = sadd.s32 %s222, 1
      %s224 = scalar_select %p221, %s222, %s223
      %p227 = pneg %p221
      %p228 = scmp.eq.s32.totalorder %s18, 1
      %p229 = por %p227, %p228
      %p230 = scmp.ne.s32.totalorder %s222, %s225
      %p231 = scmp.eq.s32.totalorder %s18, 0
      %p232 = por %p230, %p231
      %p233 = scmp.ne.s32.totalorder %s222, %s225
      %p234 = scmp.eq.s32.totalorder %s23, 1
      %p235 = por %p233, %p234
      %p236 = scmp.ne.s32.totalorder %s225, %s226
      %p237 = scmp.eq.s32.totalorder %s23, 0
      %p238 = por %p236, %p237
      %p239 = scmp.ne.s32.totalorder %s225, %s226
      %p240 = scmp.eq.s32.totalorder %s24, 1
      %p241 = por %p239, %p240
      %p243 = scmp.ne.s32.totalorder %s226, %s242
      %p244 = scmp.eq.s32.totalorder %s24, 0
      %p245 = por %p243, %p244
      %p246 = scmp.le.s32.totalorder 1, %s18
      %p247 = scmp.lt.s32.totalorder %s18, 3
      %p248 = pnand %p246, %p247
      %p249 = pneg %p248
      // Predicated region
      $region9: #{residual_block1d.1} parent=5 // pred_check
        _
      $region10: #{residual_block1d.1} parent=5 // pred_check_branch
        %251 = sbr.rel (%p248) target = $region12
      $region11: #{residual_block1d.1} parent=5 // pred_region
        %s252 = ssub.s32 %s18, 1
        // Predicated region
        $region13: #{residual_block1d.1} parent=11 // pred_check
          %p253 = pneg %p65
        $region14: #{residual_block1d.1} parent=11 // pred_check_branch
          %255 = sbr.rel (%p253) target = $region16
        $region15: #{residual_block1d.1} parent=11 // pred_region
          _
        $region16: #{residual_block1d.1} parent=11 // pred_fallthru
          _
        // Predicated region
        $region17: #{residual_block1d.1} parent=11 // pred_check
          %p256 = pneg %p86
        $region18: #{residual_block1d.1} parent=11 // pred_check_branch
          %258 = sbr.rel (%p256) target = $region20
        $region19: #{residual_block1d.1} parent=11 // pred_region
          _
        $region20: #{residual_block1d.1} parent=11 // pred_fallthru
          _
        // Predicated region
        $region21: #{residual_block1d.1} parent=11 // pred_check
          %p259 = pneg %p107
        $region22: #{residual_block1d.1} parent=11 // pred_check_branch
          %261 = sbr.rel (%p259) target = $region24
        $region23: #{residual_block1d.1} parent=11 // pred_region
          _
        $region24: #{residual_block1d.1} parent=11 // pred_fallthru
          _
        // Predicated region
        $region25: #{residual_block1d.1} parent=11 // pred_check
          %p262 = pneg %p128
        $region26: #{residual_block1d.1} parent=11 // pred_check_branch
          %264 = sbr.rel (%p262) target = $region28
        $region27: #{residual_block1d.1} parent=11 // pred_region
          _
        $region28: #{residual_block1d.1} parent=11 // pred_fallthru
          _
        // Predicated region
        $region29: #{residual_block1d.1} parent=11 // pred_check
          %p265 = pneg %p149
        $region30: #{residual_block1d.1} parent=11 // pred_check_branch
          %267 = sbr.rel (%p265) target = $region32
        $region31: #{residual_block1d.1} parent=11 // pred_region
          _
        $region32: #{residual_block1d.1} parent=11 // pred_fallthru
          _
        // Predicated region
        $region33: #{residual_block1d.1} parent=11 // pred_check
          %p268 = pneg %p170
        $region34: #{residual_block1d.1} parent=11 // pred_check_branch
          %270 = sbr.rel (%p268) target = $region36
        $region35: #{residual_block1d.1} parent=11 // pred_region
          _
        $region36: #{residual_block1d.1} parent=11 // pred_fallthru
          _
        // Predicated region
        $region37: #{residual_block1d.1} parent=11 // pred_check
          %p271 = pneg %p191
        $region38: #{residual_block1d.1} parent=11 // pred_check_branch
          %273 = sbr.rel (%p271) target = $region40
        $region39: #{residual_block1d.1} parent=11 // pred_region
          _
        $region40: #{residual_block1d.1} parent=11 // pred_fallthru
          _
        // Predicated region
        $region41: #{residual_block1d.1} parent=11 // pred_check
          %p274 = pneg %p212
        $region42: #{residual_block1d.1} parent=11 // pred_check_branch
          %276 = sbr.rel (%p274) target = $region44
        $region43: #{residual_block1d.1} parent=11 // pred_region
          _
        $region44: #{residual_block1d.1} parent=11 // pred_fallthru
          _
      $region12: #{residual_block1d.1} parent=5 // pred_fallthru
        _
      %p277 = scmp.lt.s32.totalorder %s18, 2
      // Predicated region
      $region45: #{residual_block1d.1} parent=5 // pred_check
        %p278 = pneg %p277
      $region46: #{residual_block1d.1} parent=5 // pred_check_branch
        %280 = sbr.rel (%p278) target = $region48
      $region47: #{residual_block1d.1} parent=5 // pred_region
        // Predicated region
        $region49: #{residual_block1d.1} parent=47 // pred_check
          %p281 = pneg %p38
        $region50: #{residual_block1d.1} parent=47 // pred_check_branch
          %283 = sbr.rel (%p281) target = $region52
        $region51: #{residual_block1d.1} parent=47 // pred_region
          %p284 = scmp.lt.s32.totalorder %s18, 1
          %s285 = scalar_select %p284, %s18, 1
          %s286 = smul.addr %s285, 8
          %s287 = smul.addr %s286, 8
          %s288 = scalar_lea.vmem %s0, %s287
        $region52: #{residual_block1d.1} parent=47 // pred_fallthru
          _
      $region48: #{residual_block1d.1} parent=5 // pred_fallthru
        _
      %p289 = scmp.le.s32.totalorder 1, %s18
      %p290 = scmp.lt.s32.totalorder %s18, 3
      %p291 = pnand %p289, %p290
      %p292 = pneg %p291
      // Predicated region
      $region53: #{residual_block1d.1} parent=5 // pred_check
        _
      $region54: #{residual_block1d.1} parent=5 // pred_check_branch
        %294 = sbr.rel (%p291) target = $region56
      $region55: #{residual_block1d.1} parent=5 // pred_region
        %s295 = ssub.s32 %s18, 1
        %p296 = scmp.lt.s32.totalorder %s23, 1
        %s297 = scalar_select %p296, %s23, 1
        %s298 = smul.addr %s297, 8
        %s299 = smul.addr %s298, 8
        %s300 = scalar_lea.vmem %s0, %s299
        %p301 = pneg %p44
        %p302 = pneg %p41
        %p303 = pneg %p65
        %p304 = pneg %p62
        %p305 = pneg %p86
        %p306 = pneg %p83
        %p307 = pneg %p107
        %p308 = pneg %p104
        %p309 = pneg %p128
        %p310 = pneg %p125
        %p311 = pneg %p149
        %p312 = pneg %p146
        %p313 = pneg %p170
        %p314 = pneg %p167
        %p315 = pneg %p191
        %p316 = pneg %p188
        %p317 = pneg %p212
        %p318 = pneg %p209
        %p319 = pneg %p238
        %p320 = pneg %p235
        %s321 = sand.u32 %s225, 1
        %s322 = scalar_lea.sflag [#allocation4], %s321
        %s323 = sand.u32 %s225, 1
        %s324 = smul.addr %s323, 32
        %s325 = scalar_lea.vmem [#allocation3], %s324
        %p326 = scmp.lt.s32.totalorder %s23, 1
        %s327 = scalar_select %p326, %s23, 1
        %s328 = smul.addr %s327, 8
        %s329 = smul.addr %s328, 8
        %s330 = scalar_lea.vmem %s0, %s329
        %v331 = vld [vmem:[%s330] sm:$0xff]
        %v332 = vld [vmem:[%s330 + $0x10] sm:$0xff]
        %v333 = vld [vmem:[%s330 + $0x20] sm:$0xff]
        %v334 = vld [vmem:[%s330 + $0x30] sm:$0xff]
        %v335 = vld [vmem:[%s330 + $0x8] sm:$0xff]
        %v336 = vld [vmem:[%s330 + $0x18] sm:$0xff]
        %v337 = vld [vmem:[%s330 + $0x28] sm:$0xff]
        %v338 = vld [vmem:[%s330 + $0x38] sm:$0xff]
        %347 = vrot.lane.b32.xlu0 %v331, 127
        %v348 = vpop.permute.xlu0 %347
        %349 = vrot.lane.b32.xlu0 %v335, 127
        %v350 = vpop.permute.xlu0 %349
        %351 = vrot.lane.b32.xlu0 %v332, 127
        %v352 = vpop.permute.xlu0 %351
        %353 = vrot.lane.b32.xlu0 %v336, 127
        %v354 = vpop.permute.xlu0 %353
        %355 = vrot.lane.b32.xlu0 %v333, 127
        %v356 = vpop.permute.xlu0 %355
        %357 = vrot.lane.b32.xlu0 %v337, 127
        %v358 = vpop.permute.xlu0 %357
        %359 = vrot.lane.b32.xlu0 %v334, 127
        %v360 = vpop.permute.xlu0 %359
        %361 = vrot.lane.b32.xlu0 %v338, 127
        %v362 = vpop.permute.xlu0 %361
        %vm363 = vcmask 1039360
        %v364 = vsel %vm363, %v348, %v350
        %v365 = vsel %vm363, %v352, %v354
        %v366 = vsel %vm363, %v356, %v358
        %v367 = vsel %vm363, %v360, %v362
        %372 = vrot.lane.b32.xlu0 %v331, 126
        %v373 = vpop.permute.xlu0 %372
        %374 = vrot.lane.b32.xlu0 %v335, 126
        %v375 = vpop.permute.xlu0 %374
        %376 = vrot.lane.b32.xlu0 %v332, 126
        %v377 = vpop.permute.xlu0 %376
        %378 = vrot.lane.b32.xlu0 %v336, 126
        %v379 = vpop.permute.xlu0 %378
        %380 = vrot.lane.b32.xlu0 %v333, 126
        %v381 = vpop.permute.xlu0 %380
        %382 = vrot.lane.b32.xlu0 %v337, 126
        %v383 = vpop.permute.xlu0 %382
        %384 = vrot.lane.b32.xlu0 %v334, 126
        %v385 = vpop.permute.xlu0 %384
        %386 = vrot.lane.b32.xlu0 %v338, 126
        %v387 = vpop.permute.xlu0 %386
        %vm388 = vcmask 1031168
        %v389 = vsel %vm388, %v373, %v375
        %v390 = vsel %vm388, %v377, %v379
        %v391 = vsel %vm388, %v381, %v383
        %v392 = vsel %vm388, %v385, %v387
        %v397 = vld [vmem:[%s1] sm:$0xff]
        %v398 = vld [vmem:[%s1 + $0x8] sm:$0xff]
        %v399 = vld [vmem:[%s1 + $0x10] sm:$0xff]
        %v400 = vld [vmem:[%s1 + $0x18] sm:$0xff]
        %v401 = vld [vmem:[%s2] sm:$0xff]
        %v402 = vld [vmem:[%s2 + $0x8] sm:$0xff]
        %v403 = vld [vmem:[%s2 + $0x10] sm:$0xff]
        %v404 = vld [vmem:[%s2 + $0x18] sm:$0xff]
        %406 = vset.pattern.permute.xlu0 0
        %407 = vperm.xlu0 %406, %v401
        %v408 = vpop.permute.xlu0 %407
        %411 = vset.pattern.permute.xlu0 0
        %412 = vperm.xlu0 %411, %v402
        %v413 = vpop.permute.xlu0 %412
        %416 = vset.pattern.permute.xlu0 0
        %417 = vperm.xlu0 %416, %v403
        %v418 = vpop.permute.xlu0 %417
        %421 = vset.pattern.permute.xlu0 0
        %422 = vperm.xlu0 %421, %v404
        %v423 = vpop.permute.xlu0 %422
        %vm425 = vcmask 785408
        %v427 = vsel %vm425, %v397, 0
        %v430 = vsel %vm425, %v398, 0
        %v433 = vsel %vm425, %v399, 0
        %v436 = vsel %vm425, %v400, 0
        %438 = vmatprep.subr.mxu0 0.0
        %439 = vmatpush1.msra.mxu0 0.0
        %440 = vmatprep.subr.mxu0 0.0
        %441 = vmatpush1.msra.mxu0 0.0
        %442 = vmatprep.subr.mxu0 0.0
        %443 = vmatpush1.msra.mxu0 0.0
        %444 = vmatprep.subr.mxu0 0.0
        %445 = vmatpush1.msra.mxu0 0.0
        %446 = vmatprep.subr.mxu0 0.0
        %447 = vmatpush1.msra.mxu0 %v392
        %448 = vmatprep.subr.mxu0 0.0
        %449 = vmatpush1.msra.mxu0 %v391
        %450 = vmatprep.subr.mxu0 0.0
        %451 = vmatpush1.msra.mxu0 %v390
        %452 = vmatprep.subr.mxu0 0.0
        %453 = vmatpush1.msra.mxu0 %v389
        %454 = vmatprep.subr.mxu0 0.0
        %455 = vmatpush1.msra.mxu0 %v367
        %456 = vmatprep.subr.mxu0 0.0
        %457 = vmatpush1.msra.mxu0 %v366
        %458 = vmatprep.subr.mxu0 0.0
        %459 = vmatpush1.msra.mxu0 %v365
        %460 = vmatprep.subr.mxu0 0.0
        %461 = vmatpush1.msra.mxu0 %v364
        %462 = vmatprep.subr.mxu0 0.0
        %463 = vmatpush1.msra.mxu0 %v334
        %464 = vmatprep.subr.mxu0 0.0
        %465 = vmatpush1.msra.mxu0 %v333
        %466 = vmatprep.subr.mxu0 0.0
        %467 = vmatpush1.msra.mxu0 %v332
        %468 = vmatprep.subr.mxu0 0.0
        %469 = vmatpush1.msra.mxu0 %v331
        %470 = vmatprep.subr.mxu0 0.0
        %471 = vmatpush2.msra.mxu0 0.0
        %472 = vmatprep.subr.mxu0 0.0
        %473 = vmatpush2.msra.mxu0 0.0
        %474 = vmatprep.subr.mxu0 0.0
        %475 = vmatpush2.msra.mxu0 0.0
        %476 = vmatprep.subr.mxu0 0.0
        %477 = vmatpush2.msra.mxu0 0.0
        %478 = vmatprep.subr.mxu0 0.0
        %479 = vmatpush2.msra.mxu0 0.0
        %480 = vmatprep.subr.mxu0 0.0
        %481 = vmatpush2.msra.mxu0 0.0
        %482 = vmatprep.subr.mxu0 0.0
        %483 = vmatpush2.msra.mxu0 0.0
        %484 = vmatprep.subr.mxu0 0.0
        %485 = vmatpush2.msra.mxu0 0.0
        %486 = vmatprep.subr.mxu0 0.0
        %487 = vmatpush2.msra.mxu0 0.0
        %488 = vmatprep.subr.mxu0 0.0
        %489 = vmatpush2.msra.mxu0 0.0
        %490 = vmatprep.subr.mxu0 0.0
        %491 = vmatpush2.msra.mxu0 0.0
        %492 = vmatprep.subr.mxu0 0.0
        %493 = vmatpush2.msra.mxu0 0.0
        %494 = vmatprep.subr.mxu0 0.0
        %495 = vmatpush2.msra.mxu0 0.0
        %496 = vmatprep.subr.mxu0 0.0
        %497 = vmatpush2.msra.mxu0 0.0
        %498 = vmatprep.subr.mxu0 0.0
        %499 = vmatpush2.msra.mxu0 0.0
        %500 = vmatprep.subr.mxu0 0.0
        %501 = vmatpush2.msra.mxu0 0.0
        %502 = vmatprep.mubr.f32.mxu0 0.0
        %503 = vmatmul.mubr.f32.gmra.mxu0 %v427
        %v504 = vpop.f32.mrf.mxu0
        %v505 = vadd.f32 %v408, %v504
        %v506 = vpop.f32.mrf.mxu0
        %507 = vmatprep.mubr.f32.mxu0 0.0
        %508 = vmatmul.mubr.f32.gmra.mxu0 %v430
        %v509 = vpop.f32.mrf.mxu0
        %v510 = vadd.f32 %v413, %v509
        %v511 = vpop.f32.mrf.mxu0
        %512 = vmatprep.mubr.f32.mxu0 0.0
        %513 = vmatmul.mubr.f32.gmra.mxu0 %v433
        %v514 = vpop.f32.mrf.mxu0
        %v515 = vadd.f32 %v418, %v514
        %v516 = vpop.f32.mrf.mxu0
        %517 = vmatprep.mubr.f32.mxu0 0.0
        %518 = vmatmul.mubr.f32.gmra.mxu0 %v436
        %v519 = vpop.f32.mrf.mxu0
        %v520 = vadd.f32 %v423, %v519
        %v521 = vpop.f32.mrf.mxu0
        %522 = vdwg.mxu0
        %v523 = vld [vmem:[%s3] sm:$0xff]
        %v524 = vld [vmem:[%s3 + $0x8] sm:$0xff]
        %v525 = vld [vmem:[%s3 + $0x10] sm:$0xff]
        %v526 = vld [vmem:[%s3 + $0x18] sm:$0xff]
        %v527 = vld [vmem:[%s4] sm:$0xff]
        %v528 = vld [vmem:[%s4 + $0x8] sm:$0xff]
        %v529 = vld [vmem:[%s4 + $0x10] sm:$0xff]
        %v530 = vld [vmem:[%s4 + $0x18] sm:$0xff]
        %531 = vadd.xlane.f32.xlu0 %v505
        %v532 = vpop.xlane.xlu0 %531
        %533 = vadd.xlane.f32.xlu0 %v510
        %v534 = vpop.xlane.xlu0 %533
        %535 = vadd.xlane.f32.xlu0 %v515
        %v536 = vpop.xlane.xlu0 %535
        %537 = vadd.xlane.f32.xlu0 %v520
        %v538 = vpop.xlane.xlu0 %537
        %v539 = vadd.f32 %v532, %v534
        %v540 = vadd.f32 %v539, %v536
        %v541 = vadd.f32 %v540, %v538
        %v542 = vrot.slane %v541, 4
        %v543 = vadd.f32 %v541, %v542
        %v544 = vrot.slane %v543, 2
        %v545 = vadd.f32 %v543, %v544
        %v546 = vrot.slane %v545, 1
        %v547 = vadd.f32 %v545, %v546
        %v548 = vrcp.pop 4096.0
        %v549 = vmul.f32 %v547, %v548
        %v550 = vsub.f32 %v505, %v549
        %v551 = vsub.f32 %v510, %v549
        %v552 = vsub.f32 %v515, %v549
        %v553 = vsub.f32 %v520, %v549
        %v554 = vmul.f32 %v550, %v550
        %v555 = vmul.f32 %v551, %v551
        %v556 = vmul.f32 %v552, %v552
        %v557 = vmul.f32 %v553, %v553
        %558 = vadd.xlane.f32.xlu0 %v554
        %v559 = vpop.xlane.xlu0 %558
        %560 = vadd.xlane.f32.xlu0 %v555
        %v561 = vpop.xlane.xlu0 %560
        %562 = vadd.xlane.f32.xlu0 %v556
        %v563 = vpop.xlane.xlu0 %562
        %564 = vadd.xlane.f32.xlu0 %v557
        %v565 = vpop.xlane.xlu0 %564
        %v566 = vadd.f32 %v559, %v561
        %v567 = vadd.f32 %v566, %v563
        %v568 = vadd.f32 %v567, %v565
        %v569 = vrot.slane %v568, 4
        %v570 = vadd.f32 %v568, %v569
        %v571 = vrot.slane %v570, 2
        %v572 = vadd.f32 %v570, %v571
        %v573 = vrot.slane %v572, 1
        %v574 = vadd.f32 %v572, %v573
        %v575 = vmul.f32 %v574, %v548
        %v576 = vadd.f32 %v575, 1e-05
        %v577 = vrsqrt.pop %v576
        %v578 = vmul.f32 %v550, %v577
        %v579 = vmul.f32 %v551, %v577
        %v580 = vmul.f32 %v552, %v577
        %v581 = vmul.f32 %v553, %v577
        %583 = vset.pattern.permute.xlu0 0
        %584 = vperm.xlu0 %583, %v523
        %v585 = vpop.permute.xlu0 %584
        %588 = vset.pattern.permute.xlu0 0
        %589 = vperm.xlu0 %588, %v524
        %v590 = vpop.permute.xlu0 %589
        %593 = vset.pattern.permute.xlu0 0
        %594 = vperm.xlu0 %593, %v525
        %v595 = vpop.permute.xlu0 %594
        %598 = vset.pattern.permute.xlu0 0
        %599 = vperm.xlu0 %598, %v526
        %v600 = vpop.permute.xlu0 %599
        %v602 = vmul.f32 %v578, %v585
        %v603 = vmul.f32 %v579, %v590
        %v604 = vmul.f32 %v580, %v595
        %v605 = vmul.f32 %v581, %v600
        %607 = vset.pattern.permute.xlu0 0
        %608 = vperm.xlu0 %607, %v527
        %v609 = vpop.permute.xlu0 %608
        %612 = vset.pattern.permute.xlu0 0
        %613 = vperm.xlu0 %612, %v528
        %v614 = vpop.permute.xlu0 %613
        %617 = vset.pattern.permute.xlu0 0
        %618 = vperm.xlu0 %617, %v529
        %v619 = vpop.permute.xlu0 %618
        %622 = vset.pattern.permute.xlu0 0
        %623 = vperm.xlu0 %622, %v530
        %v624 = vpop.permute.xlu0 %623
        %v626 = vadd.f32 %v602, %v609
        %v627 = vadd.f32 %v603, %v614
        %v628 = vadd.f32 %v604, %v619
        %v629 = vadd.f32 %v605, %v624
        %vm630 = vcmp.ge.f32.partialorder %v626, 0.0
        %vm631 = vcmp.ge.f32.partialorder %v627, 0.0
        %vm632 = vcmp.ge.f32.partialorder %v628, 0.0
        %vm633 = vcmp.ge.f32.partialorder %v629, 0.0
        %v634 = vmul.f32 %v626, 0.2
        %v635 = vmul.f32 %v627, 0.2
        %v636 = vmul.f32 %v628, 0.2
        %v637 = vmul.f32 %v629, 0.2
        %v638 = vsel %vm630, %v626, %v634
        %v639 = vsel %vm631, %v627, %v635
        %v640 = vsel %vm632, %v628, %v636
        %v641 = vsel %vm633, %v629, %v637
        %642 = vst [vmem:[#allocation2] sm:$0xff] 0.0
        %643 = vst [vmem:[#allocation2 + $0x8] sm:$0xff] 0.0
        %644 = vst [vmem:[#allocation2 + $0x10] sm:$0xff] 0.0
        %645 = vst [vmem:[#allocation2 + $0x18] sm:$0xff] 0.0
        %646 = vst [vmem:[#allocation2 + $0x20] sm:$0xff] 0.0
        %647 = vst [vmem:[#allocation2 + $0x28] sm:$0xff] 0.0
        %648 = vst [vmem:[#allocation2 + $0x30] sm:$0xff] 0.0
        %649 = vst [vmem:[#allocation2 + $0x38] sm:$0xff] 0.0
        %650 = vst [vmem:[#allocation2 + $0x40] sm:$0xff] 0.0
        %651 = vst [vmem:[#allocation2 + $0x48] sm:$0xff] 0.0
        %652 = vst [vmem:[#allocation2 + $0x50] sm:$0xff] 0.0
        %653 = vst [vmem:[#allocation2 + $0x58] sm:$0xff] 0.0
        %654 = vst [vmem:[#allocation2 + $0x8] sm:$0xff] %v638
        %655 = vst [vmem:[#allocation2 + $0x20] sm:$0xff] %v639
        %656 = vst [vmem:[#allocation2 + $0x38] sm:$0xff] %v640
        %657 = vst [vmem:[#allocation2 + $0x50] sm:$0xff] %v641
        %v658 = vld [vmem:[#allocation2] sm:$0xff]
        %v659 = vld [vmem:[#allocation2 + $0x8] sm:$0xff]
        %v660 = vld [vmem:[#allocation2 + $0x18] sm:$0xff]
        %v661 = vld [vmem:[#allocation2 + $0x20] sm:$0xff]
        %v662 = vld [vmem:[#allocation2 + $0x30] sm:$0xff]
        %v663 = vld [vmem:[#allocation2 + $0x38] sm:$0xff]
        %v664 = vld [vmem:[#allocation2 + $0x48] sm:$0xff]
        %v665 = vld [vmem:[#allocation2 + $0x50] sm:$0xff]
        %v666 = vld [vmem:[#allocation2 + $0x8] sm:$0xff]
        %v667 = vld [vmem:[#allocation2 + $0x10] sm:$0xff]
        %v668 = vld [vmem:[#allocation2 + $0x20] sm:$0xff]
        %v669 = vld [vmem:[#allocation2 + $0x28] sm:$0xff]
        %v670 = vld [vmem:[#allocation2 + $0x38] sm:$0xff]
        %v671 = vld [vmem:[#allocation2 + $0x40] sm:$0xff]
        %v672 = vld [vmem:[#allocation2 + $0x50] sm:$0xff]
        %v673 = vld [vmem:[#allocation2 + $0x58] sm:$0xff]
        %678 = vrot.lane.b32.xlu0 %v659, 127
        %v679 = vpop.permute.xlu0 %678
        %680 = vrot.lane.b32.xlu0 %v661, 127
        %v681 = vpop.permute.xlu0 %680
        %682 = vrot.lane.b32.xlu0 %v663, 127
        %v683 = vpop.permute.xlu0 %682
        %684 = vrot.lane.b32.xlu0 %v665, 127
        %v685 = vpop.permute.xlu0 %684
        %694 = vrot.lane.b32.xlu0 %v666, 126
        %v695 = vpop.permute.xlu0 %694
        %696 = vrot.lane.b32.xlu0 %v667, 126
        %v697 = vpop.permute.xlu0 %696
        %698 = vrot.lane.b32.xlu0 %v668, 126
        %v699 = vpop.permute.xlu0 %698
        %700 = vrot.lane.b32.xlu0 %v669, 126
        %v701 = vpop.permute.xlu0 %700
        %702 = vrot.lane.b32.xlu0 %v670, 126
        %v703 = vpop.permute.xlu0 %702
        %704 = vrot.lane.b32.xlu0 %v671, 126
        %v705 = vpop.permute.xlu0 %704
        %706 = vrot.lane.b32.xlu0 %v672, 126
        %v707 = vpop.permute.xlu0 %706
        %708 = vrot.lane.b32.xlu0 %v673, 126
        %v709 = vpop.permute.xlu0 %708
        %v710 = vsel %vm388, %v695, %v697
        %v711 = vsel %vm388, %v699, %v701
        %v712 = vsel %vm388, %v703, %v705
        %v713 = vsel %vm388, %v707, %v709
        %v714 = vld [vmem:[%s5] sm:$0xff]
        %v715 = vld [vmem:[%s5 + $0x8] sm:$0xff]
        %v716 = vld [vmem:[%s5 + $0x10] sm:$0xff]
        %v717 = vld [vmem:[%s5 + $0x18] sm:$0xff]
        %v718 = vld [vmem:[%s6] sm:$0xff]
        %v719 = vld [vmem:[%s6 + $0x8] sm:$0xff]
        %v720 = vld [vmem:[%s6 + $0x10] sm:$0xff]
        %v721 = vld [vmem:[%s6 + $0x18] sm:$0xff]
        %723 = vset.pattern.permute.xlu0 0
        %724 = vperm.xlu0 %723, %v718
        %v725 = vpop.permute.xlu0 %724
        %728 = vset.pattern.permute.xlu0 0
        %729 = vperm.xlu0 %728, %v719
        %v730 = vpop.permute.xlu0 %729
        %733 = vset.pattern.permute.xlu0 0
        %734 = vperm.xlu0 %733, %v720
        %v735 = vpop.permute.xlu0 %734
        %738 = vset.pattern.permute.xlu0 0
        %739 = vperm.xlu0 %738, %v721
        %v740 = vpop.permute.xlu0 %739
        %746 = vrot.lane.b32.xlu0 %v658, 1
        %v747 = vpop.permute.xlu0 %746
        %748 = vrot.lane.b32.xlu0 %v659, 1
        %v749 = vpop.permute.xlu0 %748
        %750 = vrot.lane.b32.xlu0 %v660, 1
        %v751 = vpop.permute.xlu0 %750
        %752 = vrot.lane.b32.xlu0 %v661, 1
        %v753 = vpop.permute.xlu0 %752
        %754 = vrot.lane.b32.xlu0 %v662, 1
        %v755 = vpop.permute.xlu0 %754
        %756 = vrot.lane.b32.xlu0 %v663, 1
        %v757 = vpop.permute.xlu0 %756
        %758 = vrot.lane.b32.xlu0 %v664, 1
        %v759 = vpop.permute.xlu0 %758
        %760 = vrot.lane.b32.xlu0 %v665, 1
        %v761 = vpop.permute.xlu0 %760
        %762 = vrot.lane.b32.xlu0 %v679, 1
        %v763 = vpop.permute.xlu0 %762
        %764 = vrot.lane.b32.xlu0 %v681, 1
        %v765 = vpop.permute.xlu0 %764
        %766 = vrot.lane.b32.xlu0 %v683, 1
        %v767 = vpop.permute.xlu0 %766
        %768 = vrot.lane.b32.xlu0 %v685, 1
        %v769 = vpop.permute.xlu0 %768
        %770 = vrot.lane.b32.xlu0 %v695, 1
        %v771 = vpop.permute.xlu0 %770
        %772 = vrot.lane.b32.xlu0 %v710, 1
        %v773 = vpop.permute.xlu0 %772
        %774 = vrot.lane.b32.xlu0 %v699, 1
        %v775 = vpop.permute.xlu0 %774
        %776 = vrot.lane.b32.xlu0 %v711, 1
        %v777 = vpop.permute.xlu0 %776
        %778 = vrot.lane.b32.xlu0 %v703, 1
        %v779 = vpop.permute.xlu0 %778
        %780 = vrot.lane.b32.xlu0 %v712, 1
        %v781 = vpop.permute.xlu0 %780
        %782 = vrot.lane.b32.xlu0 %v707, 1
        %v783 = vpop.permute.xlu0 %782
        %784 = vrot.lane.b32.xlu0 %v713, 1
        %v785 = vpop.permute.xlu0 %784
        %vm786 = vcmask 7168
        %v787 = vsel %vm786, %v747, %v749
        %v788 = vsel %vm786, %v751, %v753
        %v789 = vsel %vm786, %v755, %v757
        %v790 = vsel %vm786, %v759, %v761
        %v791 = vsel %vm786, %v771, %v773
        %v792 = vsel %vm786, %v775, %v777
        %v793 = vsel %vm786, %v779, %v781
        %v794 = vsel %vm786, %v783, %v785
        %v808 = vsel %vm425, %v714, 0
        %v811 = vsel %vm425, %v715, 0
        %v814 = vsel %vm425, %v716, 0
        %v817 = vsel %vm425, %v717, 0
        %819 = vmatprep.subr.mxu0 0.0
        %820 = vmatpush1.msra.mxu0 0.0
        %821 = vmatprep.subr.mxu0 0.0
        %822 = vmatpush1.msra.mxu0 0.0
        %823 = vmatprep.subr.mxu0 0.0
        %824 = vmatpush1.msra.mxu0 0.0
        %825 = vmatprep.subr.mxu0 0.0
        %826 = vmatpush1.msra.mxu0 0.0
        %827 = vmatprep.subr.mxu0 0.0
        %828 = vmatpush1.msra.mxu0 %v794
        %829 = vmatprep.subr.mxu0 0.0
        %830 = vmatpush1.msra.mxu0 %v793
        %831 = vmatprep.subr.mxu0 0.0
        %832 = vmatpush1.msra.mxu0 %v792
        %833 = vmatprep.subr.mxu0 0.0
        %834 = vmatpush1.msra.mxu0 %v791
        %835 = vmatprep.subr.mxu0 0.0
        %836 = vmatpush1.msra.mxu0 %v769
        %837 = vmatprep.subr.mxu0 0.0
        %838 = vmatpush1.msra.mxu0 %v767
        %839 = vmatprep.subr.mxu0 0.0
        %840 = vmatpush1.msra.mxu0 %v765
        %841 = vmatprep.subr.mxu0 0.0
        %842 = vmatpush1.msra.mxu0 %v763
        %843 = vmatprep.subr.mxu0 0.0
        %844 = vmatpush1.msra.mxu0 %v790
        %845 = vmatprep.subr.mxu0 0.0
        %846 = vmatpush1.msra.mxu0 %v789
        %847 = vmatprep.subr.mxu0 0.0
        %848 = vmatpush1.msra.mxu0 %v788
        %849 = vmatprep.subr.mxu0 0.0
        %850 = vmatpush1.msra.mxu0 %v787
        %851 = vmatprep.subr.mxu0 0.0
        %852 = vmatpush2.msra.mxu0 0.0
        %853 = vmatprep.subr.mxu0 0.0
        %854 = vmatpush2.msra.mxu0 0.0
        %855 = vmatprep.subr.mxu0 0.0
        %856 = vmatpush2.msra.mxu0 0.0
        %857 = vmatprep.subr.mxu0 0.0
        %858 = vmatpush2.msra.mxu0 0.0
        %859 = vmatprep.subr.mxu0 0.0
        %860 = vmatpush2.msra.mxu0 0.0
        %861 = vmatprep.subr.mxu0 0.0
        %862 = vmatpush2.msra.mxu0 0.0
        %863 = vmatprep.subr.mxu0 0.0
        %864 = vmatpush2.msra.mxu0 0.0
        %865 = vmatprep.subr.mxu0 0.0
        %866 = vmatpush2.msra.mxu0 0.0
        %867 = vmatprep.subr.mxu0 0.0
        %868 = vmatpush2.msra.mxu0 0.0
        %869 = vmatprep.subr.mxu0 0.0
        %870 = vmatpush2.msra.mxu0 0.0
        %871 = vmatprep.subr.mxu0 0.0
        %872 = vmatpush2.msra.mxu0 0.0
        %873 = vmatprep.subr.mxu0 0.0
        %874 = vmatpush2.msra.mxu0 0.0
        %875 = vmatprep.subr.mxu0 0.0
        %876 = vmatpush2.msra.mxu0 0.0
        %877 = vmatprep.subr.mxu0 0.0
        %878 = vmatpush2.msra.mxu0 0.0
        %879 = vmatprep.subr.mxu0 0.0
        %880 = vmatpush2.msra.mxu0 0.0
        %881 = vmatprep.subr.mxu0 0.0
        %882 = vmatpush2.msra.mxu0 0.0
        %883 = vmatprep.mubr.f32.mxu0 0.0
        %884 = vmatmul.mubr.f32.gmra.mxu0 %v808
        %v885 = vpop.f32.mrf.mxu0
        %v886 = vadd.f32 %v725, %v885
        %v887 = vpop.f32.mrf.mxu0
        %888 = vmatprep.mubr.f32.mxu0 0.0
        %889 = vmatmul.mubr.f32.gmra.mxu0 %v811
        %v890 = vpop.f32.mrf.mxu0
        %v891 = vadd.f32 %v730, %v890
        %v892 = vpop.f32.mrf.mxu0
        %893 = vmatprep.mubr.f32.mxu0 0.0
        %894 = vmatmul.mubr.f32.gmra.mxu0 %v814
        %v895 = vpop.f32.mrf.mxu0
        %v896 = vadd.f32 %v735, %v895
        %v897 = vpop.f32.mrf.mxu0
        %898 = vmatprep.mubr.f32.mxu0 0.0
        %899 = vmatmul.mubr.f32.gmra.mxu0 %v817
        %v900 = vpop.f32.mrf.mxu0
        %v901 = vadd.f32 %v740, %v900
        %v902 = vpop.f32.mrf.mxu0
        %903 = vdwg.mxu0
        %v904 = vld [vmem:[%s7] sm:$0xff]
        %v905 = vld [vmem:[%s7 + $0x8] sm:$0xff]
        %v906 = vld [vmem:[%s7 + $0x10] sm:$0xff]
        %v907 = vld [vmem:[%s7 + $0x18] sm:$0xff]
        %v908 = vld [vmem:[%s8] sm:$0xff]
        %v909 = vld [vmem:[%s8 + $0x8] sm:$0xff]
        %v910 = vld [vmem:[%s8 + $0x10] sm:$0xff]
        %v911 = vld [vmem:[%s8 + $0x18] sm:$0xff]
        %912 = vadd.xlane.f32.xlu0 %v886
        %v913 = vpop.xlane.xlu0 %912
        %914 = vadd.xlane.f32.xlu0 %v891
        %v915 = vpop.xlane.xlu0 %914
        %916 = vadd.xlane.f32.xlu0 %v896
        %v917 = vpop.xlane.xlu0 %916
        %918 = vadd.xlane.f32.xlu0 %v901
        %v919 = vpop.xlane.xlu0 %918
        %v920 = vadd.f32 %v913, %v915
        %v921 = vadd.f32 %v920, %v917
        %v922 = vadd.f32 %v921, %v919
        %v923 = vrot.slane %v922, 4
        %v924 = vadd.f32 %v922, %v923
        %v925 = vrot.slane %v924, 2
        %v926 = vadd.f32 %v924, %v925
        %v927 = vrot.slane %v926, 1
        %v928 = vadd.f32 %v926, %v927
        %v929 = vmul.f32 %v928, %v548
        %v930 = vsub.f32 %v886, %v929
        %v931 = vsub.f32 %v891, %v929
        %v932 = vsub.f32 %v896, %v929
        %v933 = vsub.f32 %v901, %v929
        %v934 = vmul.f32 %v930, %v930
        %v935 = vmul.f32 %v931, %v931
        %v936 = vmul.f32 %v932, %v932
        %v937 = vmul.f32 %v933, %v933
        %938 = vadd.xlane.f32.xlu0 %v934
        %v939 = vpop.xlane.xlu0 %938
        %940 = vadd.xlane.f32.xlu0 %v935
        %v941 = vpop.xlane.xlu0 %940
        %942 = vadd.xlane.f32.xlu0 %v936
        %v943 = vpop.xlane.xlu0 %942
        %944 = vadd.xlane.f32.xlu0 %v937
        %v945 = vpop.xlane.xlu0 %944
        %v946 = vadd.f32 %v939, %v941
        %v947 = vadd.f32 %v946, %v943
        %v948 = vadd.f32 %v947, %v945
        %v949 = vrot.slane %v948, 4
        %v950 = vadd.f32 %v948, %v949
        %v951 = vrot.slane %v950, 2
        %v952 = vadd.f32 %v950, %v951
        %v953 = vrot.slane %v952, 1
        %v954 = vadd.f32 %v952, %v953
        %v955 = vmul.f32 %v954, %v548
        %v956 = vadd.f32 %v955, 1e-05
        %v957 = vrsqrt.pop %v956
        %v958 = vmul.f32 %v930, %v957
        %v959 = vmul.f32 %v931, %v957
        %v960 = vmul.f32 %v932, %v957
        %v961 = vmul.f32 %v933, %v957
        %963 = vset.pattern.permute.xlu0 0
        %964 = vperm.xlu0 %963, %v904
        %v965 = vpop.permute.xlu0 %964
        %968 = vset.pattern.permute.xlu0 0
        %969 = vperm.xlu0 %968, %v905
        %v970 = vpop.permute.xlu0 %969
        %973 = vset.pattern.permute.xlu0 0
        %974 = vperm.xlu0 %973, %v906
        %v975 = vpop.permute.xlu0 %974
        %978 = vset.pattern.permute.xlu0 0
        %979 = vperm.xlu0 %978, %v907
        %v980 = vpop.permute.xlu0 %979
        %v982 = vmul.f32 %v958, %v965
        %v983 = vmul.f32 %v959, %v970
        %v984 = vmul.f32 %v960, %v975
        %v985 = vmul.f32 %v961, %v980
        %987 = vset.pattern.permute.xlu0 0
        %988 = vperm.xlu0 %987, %v908
        %v989 = vpop.permute.xlu0 %988
        %992 = vset.pattern.permute.xlu0 0
        %993 = vperm.xlu0 %992, %v909
        %v994 = vpop.permute.xlu0 %993
        %997 = vset.pattern.permute.xlu0 0
        %998 = vperm.xlu0 %997, %v910
        %v999 = vpop.permute.xlu0 %998
        %1002 = vset.pattern.permute.xlu0 0
        %1003 = vperm.xlu0 %1002, %v911
        %v1004 = vpop.permute.xlu0 %1003
        %v1006 = vadd.f32 %v982, %v989
        %v1007 = vadd.f32 %v983, %v994
        %v1008 = vadd.f32 %v984, %v999
        %v1009 = vadd.f32 %v985, %v1004
        %v1010 = vld [vmem:[%s330] sm:$0xff]
        %v1011 = vld [vmem:[%s330 + $0x8] sm:$0xff]
        %v1012 = vld [vmem:[%s330 + $0x10] sm:$0xff]
        %v1013 = vld [vmem:[%s330 + $0x18] sm:$0xff]
        %v1014 = vld [vmem:[%s330 + $0x20] sm:$0xff]
        %v1015 = vld [vmem:[%s330 + $0x28] sm:$0xff]
        %v1016 = vld [vmem:[%s330 + $0x30] sm:$0xff]
        %v1017 = vld [vmem:[%s330 + $0x38] sm:$0xff]
        %1022 = vrot.lane.b32.xlu0 %v1006, 1
        %v1023 = vpop.permute.xlu0 %1022
        %1024 = vrot.lane.b32.xlu0 %v1007, 1
        %v1025 = vpop.permute.xlu0 %1024
        %1026 = vrot.lane.b32.xlu0 %v1008, 1
        %v1027 = vpop.permute.xlu0 %1026
        %1028 = vrot.lane.b32.xlu0 %v1009, 1
        %v1029 = vpop.permute.xlu0 %1028
        %v1034 = vadd.f32 %v1010, %v1023
        %v1035 = vadd.f32 %v1011, %v1023
        %v1036 = vadd.f32 %v1012, %v1025
        %v1037 = vadd.f32 %v1013, %v1025
        %v1038 = vadd.f32 %v1014, %v1027
        %v1039 = vadd.f32 %v1015, %v1027
        %v1040 = vadd.f32 %v1016, %v1029
        %v1041 = vadd.f32 %v1017, %v1029
        %1050 = vrot.lane.b32.xlu0 %v1034, 127
        %v1051 = vpop.permute.xlu0 %1050
        %1052 = vrot.lane.b32.xlu0 %v1035, 127
        %v1053 = vpop.permute.xlu0 %1052
        %1054 = vrot.lane.b32.xlu0 %v1036, 127
        %v1055 = vpop.permute.xlu0 %1054
        %1056 = vrot.lane.b32.xlu0 %v1037, 127
        %v1057 = vpop.permute.xlu0 %1056
        %1058 = vrot.lane.b32.xlu0 %v1038, 127
        %v1059 = vpop.permute.xlu0 %1058
        %1060 = vrot.lane.b32.xlu0 %v1039, 127
        %v1061 = vpop.permute.xlu0 %1060
        %1062 = vrot.lane.b32.xlu0 %v1040, 127
        %v1063 = vpop.permute.xlu0 %1062
        %1064 = vrot.lane.b32.xlu0 %v1041, 127
        %v1065 = vpop.permute.xlu0 %1064
        %v1066 = vsel %vm363, %v1051, %v1053
        %v1067 = vsel %vm363, %v1055, %v1057
        %v1068 = vsel %vm363, %v1059, %v1061
        %v1069 = vsel %vm363, %v1063, %v1065
        %1074 = vst [vmem:[%s325] sm:$0xff] %v1066
        %1075 = vst [vmem:[%s325 + $0x8] sm:$0xff] %v1067
        %1076 = vst [vmem:[%s325 + $0x10] sm:$0xff] %v1068
        %1077 = vst [vmem:[%s325 + $0x18] sm:$0xff] %v1069
        %s1078 = sand.u32 %s225, 1
        %s1079 = scalar_lea.sflag [#allocation4], %s1078
        %s1080 = sand.u32 %s225, 1
        %s1081 = smul.addr %s1080, 32
        %s1082 = scalar_lea.vmem [#allocation3], %s1081
        // Predicated region
        $region57: #{residual_block1d.1} parent=55 // pred_check
          %p1083 = pneg %p235
        $region58: #{residual_block1d.1} parent=55 // pred_check_branch
          %1085 = sbr.rel (%p1083) target = $region60
        $region59: #{residual_block1d.1} parent=55 // pred_region
          %s1087 = ssub.s32 512, 512
          %1088 = vsyncadd %s1079, %s1087
          %s1089 = smul.addr %s23, 4
          %s1090 = smul.addr %s1089, 128
          %s1091 = scalar_lea.hbm %s9, %s1090
          %s1092 = sshll.u32 %s1082, 4
          %s1093 = int_to_ptr.vmem [resolvable:$true] %s1092
          %1098 = dma.vmem_to_hbm [thread:$0]  %s1093, 512, %s1091, %s1079, 128, 128, 8
        $region60: #{residual_block1d.1} parent=55 // pred_fallthru
          _
      $region56: #{residual_block1d.1} parent=5 // pred_fallthru
        _
      %p1099 = scmp.le.s32.totalorder 2, %s18
      // Predicated region
      $region61: #{residual_block1d.1} parent=5 // pred_check
        %p1100 = pneg %p1099
      $region62: #{residual_block1d.1} parent=5 // pred_check_branch
        %1102 = sbr.rel (%p1100) target = $region64
      $region63: #{residual_block1d.1} parent=5 // pred_region
        %s1103 = ssub.s32 %s18, 2
        // Predicated region
        $region65: #{residual_block1d.1} parent=63 // pred_check
          %p1104 = pneg %p241
        $region66: #{residual_block1d.1} parent=63 // pred_check_branch
          %1106 = sbr.rel (%p1104) target = $region68
        $region67: #{residual_block1d.1} parent=63 // pred_region
          %s1107 = sand.u32 %s226, 1
          %s1108 = scalar_lea.sflag [#allocation4], %s1107
          %s1109 = sand.u32 %s226, 1
          %s1110 = smul.addr %s1109, 32
          %s1111 = scalar_lea.vmem [#allocation3], %s1110
          %1112 = dma.done %s1108, 512
        $region68: #{residual_block1d.1} parent=63 // pred_fallthru
          _
      $region64: #{residual_block1d.1} parent=5 // pred_fallthru
        _
    $region6: #{residual_block1d.1} parent=1 // loop_footer
      %s22 = sadd.s32 1, %s18
    $region7: #{residual_block1d.1} parent=1 // loop_footer_branch
      %17 = sbr.rel target = $region3
    $region8: #{residual_block1d.1} parent=1 // loop_exit
      _
    %1113 = vsyncpa [#allocation4], 1
    %s1114 = scalar_lea.sflag [#allocation4], 1
    %1115 = vsyncpa %s1114, 1

</llo_original>
